<compile_context>
chip_gen: v6e
topology: v6e:2x2x1
jax: 0.10.0
libtpu: 0.0.40
codegen_flags: <defaults>
</compile_context>

<pallas_src>
import functools

import jax
import jax.numpy as jnp
from jax.experimental import pallas as pl
from jax.experimental.pallas import tpu as pltpu

ALPHA = 0.528


def _per_image_loss(yp, yt, masks):
    """Element-wise fused loss map 0.8*wce + 0.2*ce for one (H, W) image."""
    m_up, m_dn, m_lf, m_rt = masks

    # sigmoid(x) == 0.5*(tanh(x/2)+1): one EUP op instead of exp + reciprocal.
    sp = 0.5 * (jnp.tanh(0.5 * yp) + 1.0)

    def _roll(x, shift, axis):
        # normalize to a non-negative shift; wrapped positions are masked anyway
        return pltpu.roll(x, shift % x.shape[axis], axis=axis)

    def box3(x):
        # separable 3x3 box sum with zero padding (lane rolls, then sublane rolls)
        left = jnp.where(m_lf, _roll(x, 1, 1), 0.0)     # x[h, w-1]
        right = jnp.where(m_rt, _roll(x, -1, 1), 0.0)   # x[h, w+1]
        r = left + x + right
        up = jnp.where(m_up, _roll(r, 1, 0), 0.0)       # r[h-1, w]
        down = jnp.where(m_dn, _roll(r, -1, 0), 0.0)    # r[h+1, w]
        return up + r + down

    def laplace_edge(x):
        conv = 9.0 * x - box3(x)      # == 8*center - 8 neighbors, zero padded
        return jnp.abs(jnp.tanh(conv))

    yt_edge = laplace_edge(yt)
    yp_edge = laplace_edge(sp)

    # cross_entropy(y_pred_edge, y_true_edge), element-wise term
    lse_edge = jnp.log(1.0 + jnp.exp(-yp_edge))
    ce = (1.0 - yt_edge) * yp_edge + lse_edge

    # weighted_cross_entropy(sigmoid(y_pred), y_true, alpha), element-wise term
    lse_sal = jnp.log(1.0 + jnp.exp(-sp))
    wce = ((1.0 - ALPHA) * ((1.0 - yt) * sp + lse_sal)
           + (2.0 * ALPHA - 1.0) * yt * lse_sal)

    return 0.8 * wce + 0.2 * ce


def _edge_hold_loss_kernel(yp_ref, yt_ref, out_ref, *, bt):
    H, W = yp_ref.shape[1], yp_ref.shape[2]

    # Boundary masks: each block spans the full spatial dims, so block borders
    # == image borders and zero padding is "mask the wrapped roll positions".
    row = jax.lax.broadcasted_iota(jnp.int32, (H, W), 0)
    col = jax.lax.broadcasted_iota(jnp.int32, (H, W), 1)
    masks = (row >= 1, row < H - 1, col >= 1, col < W - 1)

    # Accumulate per-image loss maps elementwise (VPU); a single cross-lane
    # reduce per grid step at the end.
    loss_map = jnp.zeros((H, W), jnp.float32)
    for b in range(bt):                       # static unroll, bt <= 8
        yp = yp_ref[b].astype(jnp.float32)    # (H, W) logits
        yt = yt_ref[b].astype(jnp.float32)    # (H, W) labels
        loss_map = loss_map + _per_image_loss(yp, yt, masks)

    # Per-block partial sum -> own output slot; no cross-step accumulator, so
    # the grid axis stays "parallel" (v7x: shardable across both TCs).
    out_ref[0, 0] = jnp.sum(loss_map)


def _pick_bt(n, h, w, itemsize, budget_bytes=8 * 1024 * 1024, max_bt=8):
    """Largest divisor of n (<= max_bt) whose double-buffered input footprint fits."""
    best = 1
    for bt in range(1, min(n, max_bt) + 1):
        if n % bt:
            continue
        # 2 inputs x 2 pipeline buffers per input
        if 2 * 2 * bt * h * w * itemsize <= budget_bytes:
            best = bt
    return best


def edge_hold_loss(y_pred, y_true):
    """y_pred (logits), y_true: (N, 1, H, W). Returns scalar loss (f32)."""
    N, C, H, W = y_pred.shape
    assert C == 1, "Laplace filter is [1,1,3,3]; channel dim must be 1"
    yp = y_pred.reshape(N, H, W)   # keep native dtype (f32 or bf16); upcast in-kernel
    yt = y_true.reshape(N, H, W)

    bt = _pick_bt(N, H, W, jnp.dtype(yp.dtype).itemsize)
    num_blocks = N // bt

    kernel = functools.partial(_edge_hold_loss_kernel, bt=bt)

    partials = pl.pallas_call(
        kernel,
        out_shape=jax.ShapeDtypeStruct((num_blocks, 1), jnp.float32),
        grid_spec=pltpu.PrefetchScalarGridSpec(
            num_scalar_prefetch=0,
            grid=(num_blocks,),
            in_specs=[
                pl.BlockSpec((bt, H, W), lambda i: (i, 0, 0)),
                pl.BlockSpec((bt, H, W), lambda i: (i, 0, 0)),
            ],
            out_specs=pl.BlockSpec((1, 1), lambda i: (i, 0),
                                   memory_space=pltpu.MemorySpace.SMEM),
        ),
        compiler_params=pltpu.CompilerParams(
            # independent per-block partial sums => parallel grid axis
            dimension_semantics=("parallel",),
            # Bt is budget-capped so 32 MiB fits everywhere incl. v7x (64 MiB).
            vmem_limit_bytes=32 * 1024 * 1024,
        ),
    )(yp, yt)

    # Final reduction + mean in the wrapper (tiny: num_blocks scalars).
    return jnp.sum(partials) * (1.0 / float(N * H * W))


def _reference(y_pred, y_true):
    """Pure-JAX reference mirroring the PyTorch module."""
    lap = jnp.array([[-1, -1, -1], [-1, 8, -1], [-1, -1, -1]],
                    jnp.float32).reshape(1, 1, 3, 3)
    sp = jax.nn.sigmoid(y_pred.astype(jnp.float32))

    def edge(x):
        e = jax.lax.conv_general_dilated(
            x.astype(jnp.float32), lap, window_strides=(1, 1),
            padding=((1, 1), (1, 1)),
            dimension_numbers=("NCHW", "OIHW", "NCHW"))
        return jnp.abs(jnp.tanh(e))

    yt_e = edge(y_true)
    yp_e = edge(sp)
    ce = jnp.mean((1.0 - yt_e) * yp_e + jnp.log(1.0 + jnp.exp(-yp_e)))
    lse = jnp.log(1.0 + jnp.exp(-sp))
    wce = jnp.mean((1.0 - ALPHA) * ((1.0 - y_true) * sp + lse)
                   + (2.0 * ALPHA - 1.0) * y_true * lse)
    return 0.8 * wce + 0.2 * ce


if __name__ == "__main__":
    key = jax.random.PRNGKey(0)
    k1, k2 = jax.random.split(key)
    # W lane-dense multiple of 128; kernel also handles arbitrary H, W since
    # each block spans the full spatial dims.
    N, C, H, W = 2, 1, 16, 128
    y_pred = jax.random.normal(k1, (N, C, H, W), dtype=jnp.float32)            # logits
    y_true = (jax.random.uniform(k2, (N, C, H, W)) > 0.5).astype(jnp.float32)  # binary mask

    loss = jax.block_until_ready(edge_hold_loss(y_pred, y_true))
    ref = jax.block_until_ready(_reference(y_pred, y_true))

    assert jnp.allclose(loss, ref, atol=1e-5, rtol=1e-5), (loss, ref)
    print("KERNEL_OK")
</pallas_src>

<mosaic_0001>
module attributes {stable_mosaic.version = 11 : i64} {
  func.func @_edge_hold_loss_kernel(%arg0: i32, %arg1: memref<2x16x128xf32, #tpu.memory_space<vmem>>, %arg2: memref<2x16x128xf32, #tpu.memory_space<vmem>>, %arg3: memref<1x1xf32, #tpu.memory_space<smem>>) attributes {dimension_semantics = [#tpu.dimension_semantics<parallel>], iteration_bounds = array<i64: 1>, scalar_prefetch = 0 : i64, scratch_operands = 0 : i64, tpu.core_type = #tpu.core_type<tc>, window_params = [{transform_indices = @transform_0, window_bounds = array<i64: 2, 16, 128>}, {transform_indices = @transform_1, window_bounds = array<i64: 2, 16, 128>}, {transform_indices = @transform_2, window_bounds = array<i64: 1, 1>}]} {
    %0 = tpu.iota {dimensions = array<i32: 0>} : vector<16x128xi32>
    %1 = tpu.iota {dimensions = array<i32: 1>} : vector<16x128xi32>
    %c1_i32 = arith.constant 1 : i32
    %2 = vector.broadcast %c1_i32 : i32 to vector<16x128xi32>
    %3 = arith.cmpi sge, %0, %2 : vector<16x128xi32>
    %c15_i32 = arith.constant 15 : i32
    %4 = vector.broadcast %c15_i32 : i32 to vector<16x128xi32>
    %5 = arith.cmpi slt, %0, %4 : vector<16x128xi32>
    %c1_i32_0 = arith.constant 1 : i32
    %6 = vector.broadcast %c1_i32_0 : i32 to vector<16x128xi32>
    %7 = arith.cmpi sge, %1, %6 : vector<16x128xi32>
    %c127_i32 = arith.constant 127 : i32
    %8 = vector.broadcast %c127_i32 : i32 to vector<16x128xi32>
    %9 = arith.cmpi slt, %1, %8 : vector<16x128xi32>
    %cst = arith.constant 0.000000e+00 : f32
    %10 = vector.broadcast %cst : f32 to vector<16x128xf32>
    %c0 = arith.constant 0 : index
    %c0_1 = arith.constant 0 : index
    %c0_2 = arith.constant 0 : index
    %11 = vector.load %arg1[%c0, %c0_1, %c0_2] : memref<2x16x128xf32, #tpu.memory_space<vmem>>, vector<1x16x128xf32>
    %12 = vector.shape_cast %11 : vector<1x16x128xf32> to vector<16x128xf32>
    %c0_3 = arith.constant 0 : index
    %c0_4 = arith.constant 0 : index
    %c0_5 = arith.constant 0 : index
    %13 = vector.load %arg2[%c0_3, %c0_4, %c0_5] : memref<2x16x128xf32, #tpu.memory_space<vmem>>, vector<1x16x128xf32>
    %14 = vector.shape_cast %13 : vector<1x16x128xf32> to vector<16x128xf32>
    %cst_6 = arith.constant 5.000000e-01 : f32
    %15 = vector.broadcast %cst_6 : f32 to vector<16x128xf32>
    %16 = arith.mulf %15, %12 : vector<16x128xf32>
    %17 = math.tanh %16 : vector<16x128xf32>
    %cst_7 = arith.constant 1.000000e+00 : f32
    %18 = vector.broadcast %cst_7 : f32 to vector<16x128xf32>
    %19 = arith.addf %17, %18 : vector<16x128xf32>
    %cst_8 = arith.constant 5.000000e-01 : f32
    %20 = vector.broadcast %cst_8 : f32 to vector<16x128xf32>
    %21 = arith.mulf %20, %19 : vector<16x128xf32>
    %cst_9 = arith.constant 9.000000e+00 : f32
    %22 = vector.broadcast %cst_9 : f32 to vector<16x128xf32>
    %23 = arith.mulf %22, %14 : vector<16x128xf32>
    %c1_i32_10 = arith.constant 1 : i32
    %24 = tpu.dynamic_rotate %14 by %c1_i32_10 dim 1 : vector<16x128xf32>, i32 -> vector<16x128xf32>
    %cst_11 = arith.constant 0.000000e+00 : f32
    %25 = vector.broadcast %cst_11 : f32 to vector<16x128xf32>
    %26 = arith.select %7, %24, %25 : vector<16x128xi1>, vector<16x128xf32>
    %c127_i32_12 = arith.constant 127 : i32
    %27 = tpu.dynamic_rotate %14 by %c127_i32_12 dim 1 : vector<16x128xf32>, i32 -> vector<16x128xf32>
    %cst_13 = arith.constant 0.000000e+00 : f32
    %28 = vector.broadcast %cst_13 : f32 to vector<16x128xf32>
    %29 = arith.select %9, %27, %28 : vector<16x128xi1>, vector<16x128xf32>
    %30 = arith.addf %26, %14 : vector<16x128xf32>
    %31 = arith.addf %30, %29 : vector<16x128xf32>
    %c1_i32_14 = arith.constant 1 : i32
    %32 = tpu.dynamic_rotate %31 by %c1_i32_14 dim 0 : vector<16x128xf32>, i32 -> vector<16x128xf32>
    %cst_15 = arith.constant 0.000000e+00 : f32
    %33 = vector.broadcast %cst_15 : f32 to vector<16x128xf32>
    %34 = arith.select %3, %32, %33 : vector<16x128xi1>, vector<16x128xf32>
    %c15_i32_16 = arith.constant 15 : i32
    %35 = tpu.dynamic_rotate %31 by %c15_i32_16 dim 0 : vector<16x128xf32>, i32 -> vector<16x128xf32>
    %cst_17 = arith.constant 0.000000e+00 : f32
    %36 = vector.broadcast %cst_17 : f32 to vector<16x128xf32>
    %37 = arith.select %5, %35, %36 : vector<16x128xi1>, vector<16x128xf32>
    %38 = arith.addf %34, %31 : vector<16x128xf32>
    %39 = arith.addf %38, %37 : vector<16x128xf32>
    %40 = arith.subf %23, %39 : vector<16x128xf32>
    %41 = math.tanh %40 : vector<16x128xf32>
    %42 = math.absf %41 : vector<16x128xf32>
    %cst_18 = arith.constant 9.000000e+00 : f32
    %43 = vector.broadcast %cst_18 : f32 to vector<16x128xf32>
    %44 = arith.mulf %43, %21 : vector<16x128xf32>
    %c1_i32_19 = arith.constant 1 : i32
    %45 = tpu.dynamic_rotate %21 by %c1_i32_19 dim 1 : vector<16x128xf32>, i32 -> vector<16x128xf32>
    %cst_20 = arith.constant 0.000000e+00 : f32
    %46 = vector.broadcast %cst_20 : f32 to vector<16x128xf32>
    %47 = arith.select %7, %45, %46 : vector<16x128xi1>, vector<16x128xf32>
    %c127_i32_21 = arith.constant 127 : i32
    %48 = tpu.dynamic_rotate %21 by %c127_i32_21 dim 1 : vector<16x128xf32>, i32 -> vector<16x128xf32>
    %cst_22 = arith.constant 0.000000e+00 : f32
    %49 = vector.broadcast %cst_22 : f32 to vector<16x128xf32>
    %50 = arith.select %9, %48, %49 : vector<16x128xi1>, vector<16x128xf32>
    %51 = arith.addf %47, %21 : vector<16x128xf32>
    %52 = arith.addf %51, %50 : vector<16x128xf32>
    %c1_i32_23 = arith.constant 1 : i32
    %53 = tpu.dynamic_rotate %52 by %c1_i32_23 dim 0 : vector<16x128xf32>, i32 -> vector<16x128xf32>
    %cst_24 = arith.constant 0.000000e+00 : f32
    %54 = vector.broadcast %cst_24 : f32 to vector<16x128xf32>
    %55 = arith.select %3, %53, %54 : vector<16x128xi1>, vector<16x128xf32>
    %c15_i32_25 = arith.constant 15 : i32
    %56 = tpu.dynamic_rotate %52 by %c15_i32_25 dim 0 : vector<16x128xf32>, i32 -> vector<16x128xf32>
    %cst_26 = arith.constant 0.000000e+00 : f32
    %57 = vector.broadcast %cst_26 : f32 to vector<16x128xf32>
    %58 = arith.select %5, %56, %57 : vector<16x128xi1>, vector<16x128xf32>
    %59 = arith.addf %55, %52 : vector<16x128xf32>
    %60 = arith.addf %59, %58 : vector<16x128xf32>
    %61 = arith.subf %44, %60 : vector<16x128xf32>
    %62 = math.tanh %61 : vector<16x128xf32>
    %63 = math.absf %62 : vector<16x128xf32>
    %cst_27 = arith.constant 0.000000e+00 : f32
    %64 = vector.broadcast %cst_27 : f32 to vector<16x128xf32>
    %65 = arith.subf %64, %63 : vector<16x128xf32>
    %66 = math.exp %65 : vector<16x128xf32>
    %cst_28 = arith.constant 1.000000e+00 : f32
    %67 = vector.broadcast %cst_28 : f32 to vector<16x128xf32>
    %68 = arith.addf %67, %66 : vector<16x128xf32>
    %69 = math.log %68 : vector<16x128xf32>
    %cst_29 = arith.constant 1.000000e+00 : f32
    %70 = vector.broadcast %cst_29 : f32 to vector<16x128xf32>
    %71 = arith.subf %70, %42 : vector<16x128xf32>
    %72 = arith.mulf %71, %63 : vector<16x128xf32>
    %73 = arith.addf %72, %69 : vector<16x128xf32>
    %cst_30 = arith.constant 0.000000e+00 : f32
    %74 = vector.broadcast %cst_30 : f32 to vector<16x128xf32>
    %75 = arith.subf %74, %21 : vector<16x128xf32>
    %76 = math.exp %75 : vector<16x128xf32>
    %cst_31 = arith.constant 1.000000e+00 : f32
    %77 = vector.broadcast %cst_31 : f32 to vector<16x128xf32>
    %78 = arith.addf %77, %76 : vector<16x128xf32>
    %79 = math.log %78 : vector<16x128xf32>
    %cst_32 = arith.constant 1.000000e+00 : f32
    %80 = vector.broadcast %cst_32 : f32 to vector<16x128xf32>
    %81 = arith.subf %80, %14 : vector<16x128xf32>
    %82 = arith.mulf %81, %21 : vector<16x128xf32>
    %83 = arith.addf %82, %79 : vector<16x128xf32>
    %cst_33 = arith.constant 4.720000e-01 : f32
    %84 = vector.broadcast %cst_33 : f32 to vector<16x128xf32>
    %85 = arith.mulf %84, %83 : vector<16x128xf32>
    %cst_34 = arith.constant 5.600000e-02 : f32
    %86 = vector.broadcast %cst_34 : f32 to vector<16x128xf32>
    %87 = arith.mulf %86, %14 : vector<16x128xf32>
    %88 = arith.mulf %87, %79 : vector<16x128xf32>
    %89 = arith.addf %85, %88 : vector<16x128xf32>
    %cst_35 = arith.constant 8.000000e-01 : f32
    %90 = vector.broadcast %cst_35 : f32 to vector<16x128xf32>
    %91 = arith.mulf %90, %89 : vector<16x128xf32>
    %cst_36 = arith.constant 2.000000e-01 : f32
    %92 = vector.broadcast %cst_36 : f32 to vector<16x128xf32>
    %93 = arith.mulf %92, %73 : vector<16x128xf32>
    %94 = arith.addf %91, %93 : vector<16x128xf32>
    %95 = arith.addf %10, %94 : vector<16x128xf32>
    %c1 = arith.constant 1 : index
    %c0_37 = arith.constant 0 : index
    %c0_38 = arith.constant 0 : index
    %96 = vector.load %arg1[%c1, %c0_37, %c0_38] : memref<2x16x128xf32, #tpu.memory_space<vmem>>, vector<1x16x128xf32>
    %97 = vector.shape_cast %96 : vector<1x16x128xf32> to vector<16x128xf32>
    %c1_39 = arith.constant 1 : index
    %c0_40 = arith.constant 0 : index
    %c0_41 = arith.constant 0 : index
    %98 = vector.load %arg2[%c1_39, %c0_40, %c0_41] : memref<2x16x128xf32, #tpu.memory_space<vmem>>, vector<1x16x128xf32>
    %99 = vector.shape_cast %98 : vector<1x16x128xf32> to vector<16x128xf32>
    %cst_42 = arith.constant 5.000000e-01 : f32
    %100 = vector.broadcast %cst_42 : f32 to vector<16x128xf32>
    %101 = arith.mulf %100, %97 : vector<16x128xf32>
    %102 = math.tanh %101 : vector<16x128xf32>
    %cst_43 = arith.constant 1.000000e+00 : f32
    %103 = vector.broadcast %cst_43 : f32 to vector<16x128xf32>
    %104 = arith.addf %102, %103 : vector<16x128xf32>
    %cst_44 = arith.constant 5.000000e-01 : f32
    %105 = vector.broadcast %cst_44 : f32 to vector<16x128xf32>
    %106 = arith.mulf %105, %104 : vector<16x128xf32>
    %cst_45 = arith.constant 9.000000e+00 : f32
    %107 = vector.broadcast %cst_45 : f32 to vector<16x128xf32>
    %108 = arith.mulf %107, %99 : vector<16x128xf32>
    %c1_i32_46 = arith.constant 1 : i32
    %109 = tpu.dynamic_rotate %99 by %c1_i32_46 dim 1 : vector<16x128xf32>, i32 -> vector<16x128xf32>
    %cst_47 = arith.constant 0.000000e+00 : f32
    %110 = vector.broadcast %cst_47 : f32 to vector<16x128xf32>
    %111 = arith.select %7, %109, %110 : vector<16x128xi1>, vector<16x128xf32>
    %c127_i32_48 = arith.constant 127 : i32
    %112 = tpu.dynamic_rotate %99 by %c127_i32_48 dim 1 : vector<16x128xf32>, i32 -> vector<16x128xf32>
    %cst_49 = arith.constant 0.000000e+00 : f32
    %113 = vector.broadcast %cst_49 : f32 to vector<16x128xf32>
    %114 = arith.select %9, %112, %113 : vector<16x128xi1>, vector<16x128xf32>
    %115 = arith.addf %111, %99 : vector<16x128xf32>
    %116 = arith.addf %115, %114 : vector<16x128xf32>
    %c1_i32_50 = arith.constant 1 : i32
    %117 = tpu.dynamic_rotate %116 by %c1_i32_50 dim 0 : vector<16x128xf32>, i32 -> vector<16x128xf32>
    %cst_51 = arith.constant 0.000000e+00 : f32
    %118 = vector.broadcast %cst_51 : f32 to vector<16x128xf32>
    %119 = arith.select %3, %117, %118 : vector<16x128xi1>, vector<16x128xf32>
    %c15_i32_52 = arith.constant 15 : i32
    %120 = tpu.dynamic_rotate %116 by %c15_i32_52 dim 0 : vector<16x128xf32>, i32 -> vector<16x128xf32>
    %cst_53 = arith.constant 0.000000e+00 : f32
    %121 = vector.broadcast %cst_53 : f32 to vector<16x128xf32>
    %122 = arith.select %5, %120, %121 : vector<16x128xi1>, vector<16x128xf32>
    %123 = arith.addf %119, %116 : vector<16x128xf32>
    %124 = arith.addf %123, %122 : vector<16x128xf32>
    %125 = arith.subf %108, %124 : vector<16x128xf32>
    %126 = math.tanh %125 : vector<16x128xf32>
    %127 = math.absf %126 : vector<16x128xf32>
    %cst_54 = arith.constant 9.000000e+00 : f32
    %128 = vector.broadcast %cst_54 : f32 to vector<16x128xf32>
    %129 = arith.mulf %128, %106 : vector<16x128xf32>
    %c1_i32_55 = arith.constant 1 : i32
    %130 = tpu.dynamic_rotate %106 by %c1_i32_55 dim 1 : vector<16x128xf32>, i32 -> vector<16x128xf32>
    %cst_56 = arith.constant 0.000000e+00 : f32
    %131 = vector.broadcast %cst_56 : f32 to vector<16x128xf32>
    %132 = arith.select %7, %130, %131 : vector<16x128xi1>, vector<16x128xf32>
    %c127_i32_57 = arith.constant 127 : i32
    %133 = tpu.dynamic_rotate %106 by %c127_i32_57 dim 1 : vector<16x128xf32>, i32 -> vector<16x128xf32>
    %cst_58 = arith.constant 0.000000e+00 : f32
    %134 = vector.broadcast %cst_58 : f32 to vector<16x128xf32>
    %135 = arith.select %9, %133, %134 : vector<16x128xi1>, vector<16x128xf32>
    %136 = arith.addf %132, %106 : vector<16x128xf32>
    %137 = arith.addf %136, %135 : vector<16x128xf32>
    %c1_i32_59 = arith.constant 1 : i32
    %138 = tpu.dynamic_rotate %137 by %c1_i32_59 dim 0 : vector<16x128xf32>, i32 -> vector<16x128xf32>
    %cst_60 = arith.constant 0.000000e+00 : f32
    %139 = vector.broadcast %cst_60 : f32 to vector<16x128xf32>
    %140 = arith.select %3, %138, %139 : vector<16x128xi1>, vector<16x128xf32>
    %c15_i32_61 = arith.constant 15 : i32
    %141 = tpu.dynamic_rotate %137 by %c15_i32_61 dim 0 : vector<16x128xf32>, i32 -> vector<16x128xf32>
    %cst_62 = arith.constant 0.000000e+00 : f32
    %142 = vector.broadcast %cst_62 : f32 to vector<16x128xf32>
    %143 = arith.select %5, %141, %142 : vector<16x128xi1>, vector<16x128xf32>
    %144 = arith.addf %140, %137 : vector<16x128xf32>
    %145 = arith.addf %144, %143 : vector<16x128xf32>
    %146 = arith.subf %129, %145 : vector<16x128xf32>
    %147 = math.tanh %146 : vector<16x128xf32>
    %148 = math.absf %147 : vector<16x128xf32>
    %cst_63 = arith.constant 0.000000e+00 : f32
    %149 = vector.broadcast %cst_63 : f32 to vector<16x128xf32>
    %150 = arith.subf %149, %148 : vector<16x128xf32>
    %151 = math.exp %150 : vector<16x128xf32>
    %cst_64 = arith.constant 1.000000e+00 : f32
    %152 = vector.broadcast %cst_64 : f32 to vector<16x128xf32>
    %153 = arith.addf %152, %151 : vector<16x128xf32>
    %154 = math.log %153 : vector<16x128xf32>
    %cst_65 = arith.constant 1.000000e+00 : f32
    %155 = vector.broadcast %cst_65 : f32 to vector<16x128xf32>
    %156 = arith.subf %155, %127 : vector<16x128xf32>
    %157 = arith.mulf %156, %148 : vector<16x128xf32>
    %158 = arith.addf %157, %154 : vector<16x128xf32>
    %cst_66 = arith.constant 0.000000e+00 : f32
    %159 = vector.broadcast %cst_66 : f32 to vector<16x128xf32>
    %160 = arith.subf %159, %106 : vector<16x128xf32>
    %161 = math.exp %160 : vector<16x128xf32>
    %cst_67 = arith.constant 1.000000e+00 : f32
    %162 = vector.broadcast %cst_67 : f32 to vector<16x128xf32>
    %163 = arith.addf %162, %161 : vector<16x128xf32>
    %164 = math.log %163 : vector<16x128xf32>
    %cst_68 = arith.constant 1.000000e+00 : f32
    %165 = vector.broadcast %cst_68 : f32 to vector<16x128xf32>
    %166 = arith.subf %165, %99 : vector<16x128xf32>
    %167 = arith.mulf %166, %106 : vector<16x128xf32>
    %168 = arith.addf %167, %164 : vector<16x128xf32>
    %cst_69 = arith.constant 4.720000e-01 : f32
    %169 = vector.broadcast %cst_69 : f32 to vector<16x128xf32>
    %170 = arith.mulf %169, %168 : vector<16x128xf32>
    %cst_70 = arith.constant 5.600000e-02 : f32
    %171 = vector.broadcast %cst_70 : f32 to vector<16x128xf32>
    %172 = arith.mulf %171, %99 : vector<16x128xf32>
    %173 = arith.mulf %172, %164 : vector<16x128xf32>
    %174 = arith.addf %170, %173 : vector<16x128xf32>
    %cst_71 = arith.constant 8.000000e-01 : f32
    %175 = vector.broadcast %cst_71 : f32 to vector<16x128xf32>
    %176 = arith.mulf %175, %174 : vector<16x128xf32>
    %cst_72 = arith.constant 2.000000e-01 : f32
    %177 = vector.broadcast %cst_72 : f32 to vector<16x128xf32>
    %178 = arith.mulf %177, %158 : vector<16x128xf32>
    %179 = arith.addf %176, %178 : vector<16x128xf32>
    %180 = arith.addf %95, %179 : vector<16x128xf32>
    %181 = vector.shape_cast %180 : vector<16x128xf32> to vector<1x16x128xf32>
    %cst_73 = arith.constant dense<0.000000e+00> : vector<1xf32>
    %182 = vector.multi_reduction <add>, %181, %cst_73 [1, 2] : vector<1x16x128xf32> to vector<1xf32>
    %183 = vector.shape_cast %182 : vector<1xf32> to vector<1x1x1xf32>
    %184 = vector.extract %183[0, 0, 0] : f32 from vector<1x1x1xf32>
    %c0_74 = arith.constant 0 : index
    %c0_75 = arith.constant 0 : index
    %185 = memref.load %arg3[%c0_74, %c0_75] : memref<1x1xf32, #tpu.memory_space<smem>>
    memref.store %184, %arg3[%c0_74, %c0_75] : memref<1x1xf32, #tpu.memory_space<smem>>
    return
  }
  func.func @transform_0(%arg0: i32) -> (i32, i32, i32) {
    %c0_i32 = arith.constant 0 : i32
    %c0_i32_0 = arith.constant 0 : i32
    %c0_i32_1 = arith.constant 0 : i32
    return %arg0, %c0_i32, %c0_i32_0 : i32, i32, i32
  }
  func.func @transform_1(%arg0: i32) -> (i32, i32, i32) {
    %c0_i32 = arith.constant 0 : i32
    %c0_i32_0 = arith.constant 0 : i32
    %c0_i32_1 = arith.constant 0 : i32
    return %arg0, %c0_i32, %c0_i32_0 : i32, i32, i32
  }
  func.func @transform_2(%arg0: i32) -> (i32, i32) {
    %c0_i32 = arith.constant 0 : i32
    %c0_i32_0 = arith.constant 0 : i32
    return %arg0, %c0_i32 : i32, i32
  }
}

</mosaic_0001>

<llo_original>
// kernel: tpu_custom_call.1
$region0: #{tpu_custom_call.1}
  #allocation0 [shape = 'u32[]', space=smem, size = 0x4, offset = 0x4, fixed_abs, tag = 'smem constant byte address 0x4 - core index']
  #allocation1 [shape = 'u32[144,128]{1,0:T(1,128)}', space=vmem, size = 0x12000, scoped, tag = 'internal scratch']
  %s0 = inlined_call_operand.hbm [shape: f32[2,16,128], index: 0, kind: input, shape index: {}]
  %s1 = inlined_call_operand.hbm [shape: f32[2,16,128], index: 1, kind: input, shape index: {}]
  %s2 = inlined_call_operand.hbm [shape: f32[1,1], index: 2, kind: output, shape index: {}]
  %s3 = sld [smem:[#allocation0]]
  $region26: #{tpu_custom_call.1} parent=0
    _
  %s5 = ssub.s32 1, %s3
  %s6 = scalar_select 0, %s5, %s3
  $region1: #{tpu_custom_call.1} parent=0
    #allocation2 [shape = 'u8[16384]{0}', space=vmem, size = 0x4000, scoped, tag = 'input window, operand 0, single buffered']
    #allocation3 [shape = 's32[1]{0}', space=sflag, size = 0x4, scoped, tag = 'scoped memory for tpu_custom_call.1']
    #allocation4 [shape = 's32[1]{0}', space=sflag, size = 0x4, scoped, tag = 'scoped memory for tpu_custom_call.1']
    #allocation5 [shape = 'u8[16384]{0}', space=vmem, size = 0x4000, scoped, tag = 'input window, operand 1, single buffered']
    #allocation6 [shape = 's32[1]{0}', space=sflag, size = 0x4, scoped, tag = 'scoped memory for tpu_custom_call.1']
    #allocation7 [shape = 'u8[512]{0}', space=smem, size = 0x200, scoped, tag = 'output window, operand 0, single buffered']
    %7 = vsyncpa [#allocation3], 0
    %8 = vsyncpa [#allocation6], 0
    %9 = vsyncpa [#allocation4], 0
    // Predicated region
    $region2: #{tpu_custom_call.1} parent=1 // pred_check
      _
    $region3: #{tpu_custom_call.1} parent=1 // pred_check_branch
      %11 = sbr.rel (0) target = $region5
    $region4: #{tpu_custom_call.1} parent=1 // pred_region
      %s13 = ssub.s32 512, 512
      %14 = vsyncadd [#allocation3], %s13
      %s15 = sshll.u32 [#allocation2], 4
      %s16 = int_to_ptr.vmem [resolvable:$true] %s15
      %21 = dma.hbm_to_vmem [thread:$0]  %s0, 512, %s16, [#allocation3], 128, 128, 8
    $region5: #{tpu_custom_call.1} parent=1 // pred_fallthru
      _
    // Predicated region
    $region6: #{tpu_custom_call.1} parent=1 // pred_check
      _
    $region7: #{tpu_custom_call.1} parent=1 // pred_check_branch
      %23 = sbr.rel (0) target = $region9
    $region8: #{tpu_custom_call.1} parent=1 // pred_region
      %s25 = ssub.s32 512, 512
      %26 = vsyncadd [#allocation6], %s25
      %s27 = sshll.u32 [#allocation5], 4
      %s28 = int_to_ptr.vmem [resolvable:$true] %s27
      %33 = dma.hbm_to_vmem [thread:$0]  %s1, 512, %s28, [#allocation6], 128, 128, 8
    $region9: #{tpu_custom_call.1} parent=1 // pred_fallthru
      _
    // Predicated region
    $region10: #{tpu_custom_call.1} parent=1 // pred_check
      _
    $region11: #{tpu_custom_call.1} parent=1 // pred_check_branch
      %35 = sbr.rel (0) target = $region13
    $region12: #{tpu_custom_call.1} parent=1 // pred_region
      %36 = dma.done [#allocation3], 512
    $region13: #{tpu_custom_call.1} parent=1 // pred_fallthru
      _
    // Predicated region
    $region14: #{tpu_custom_call.1} parent=1 // pred_check
      _
    $region15: #{tpu_custom_call.1} parent=1 // pred_check_branch
      %38 = sbr.rel (0) target = $region17
    $region16: #{tpu_custom_call.1} parent=1 // pred_region
      %39 = dma.done [#allocation6], 512
    $region17: #{tpu_custom_call.1} parent=1 // pred_fallthru
      _
    %v40 = vlaneseq
    %v41 = vshrl.u32 %v40, 7
    %v42 = vadd.s32 %v41, 8
    %v43 = vlaneseq
    %v44 = vand.u32 %v43, 127
    %vm45 = vcmp.ge.s32.totalorder %v41, 1
    %vm46 = vcmp.ge.s32.totalorder %v42, 1
    %vm47 = vcmp.lt.s32.totalorder %v41, 15
    %vm48 = vcmp.lt.s32.totalorder %v42, 15
    %vm49 = vcmp.ge.s32.totalorder %v44, 1
    %vm50 = vcmp.lt.s32.totalorder %v44, 127
    %v51 = vld [vmem:[#allocation2] sm:$0xff]
    %v52 = vld [vmem:[#allocation2 + $0x8] sm:$0xff]
    %v53 = vld [vmem:[#allocation5] sm:$0xff]
    %v54 = vld [vmem:[#allocation5 + $0x8] sm:$0xff]
    %v55 = vmul.f32 %v51, 0.5
    %v56 = vmul.f32 %v52, 0.5
    %v57 = vtanh.pop %v55
    %v58 = vtanh.pop %v56
    %v59 = vadd.f32 %v57, 1.0
    %v60 = vadd.f32 %v58, 1.0
    %v61 = vmul.f32 %v59, 0.5
    %v62 = vmul.f32 %v60, 0.5
    %v63 = vmul.f32 %v53, 9.0
    %v64 = vmul.f32 %v54, 9.0
    %65 = vrot.lane.b32.xlu0 %v53, 1
    %v66 = vpop.permute.xlu0 %65
    %67 = vrot.lane.b32.xlu0 %v54, 1
    %v68 = vpop.permute.xlu0 %67
    %v69 = vsel %vm49, %v66, 0.0
    %v70 = vsel %vm49, %v68, 0.0
    %71 = vrot.lane.b32.xlu0 %v53, 127
    %v72 = vpop.permute.xlu0 %71
    %73 = vrot.lane.b32.xlu0 %v54, 127
    %v74 = vpop.permute.xlu0 %73
    %v75 = vsel %vm50, %v72, 0.0
    %v76 = vsel %vm50, %v74, 0.0
    %v77 = vadd.f32 %v69, %v53
    %v78 = vadd.f32 %v70, %v54
    %v79 = vadd.f32 %v77, %v75
    %v80 = vadd.f32 %v78, %v76
    %v81 = vrot.slane %v79, 7
    %v82 = vrot.slane %v80, 7
    %vm83 = vcmp.lt.s32.totalorder %v41, 1
    %v84 = vsel %vm83, %v81, %v82
    %v85 = vsel %vm83, %v82, %v81
    %v86 = vsel %vm45, %v85, 0.0
    %v87 = vsel %vm46, %v84, 0.0
    %v88 = vrot.slane %v79, 1
    %v89 = vrot.slane %v80, 1
    %vm90 = vcmp.lt.s32.totalorder %v41, 7
    %v91 = vsel %vm90, %v88, %v89
    %v92 = vsel %vm90, %v89, %v88
    %v93 = vsel %vm47, %v91, 0.0
    %v94 = vsel %vm48, %v92, 0.0
    %v95 = vadd.f32 %v86, %v79
    %v96 = vadd.f32 %v87, %v80
    %v97 = vadd.f32 %v95, %v93
    %v98 = vadd.f32 %v96, %v94
    %v99 = vsub.f32 %v63, %v97
    %v100 = vsub.f32 %v64, %v98
    %v101 = vtanh.pop %v99
    %v102 = vtanh.pop %v100
    %v103 = vand.u32 2147483647, %v101
    %v104 = vand.u32 2147483647, %v102
    %v105 = vmul.f32 %v61, 9.0
    %v106 = vmul.f32 %v62, 9.0
    %107 = vrot.lane.b32.xlu0 %v61, 1
    %v108 = vpop.permute.xlu0 %107
    %109 = vrot.lane.b32.xlu0 %v62, 1
    %v110 = vpop.permute.xlu0 %109
    %v111 = vsel %vm49, %v108, 0.0
    %v112 = vsel %vm49, %v110, 0.0
    %113 = vrot.lane.b32.xlu0 %v61, 127
    %v114 = vpop.permute.xlu0 %113
    %115 = vrot.lane.b32.xlu0 %v62, 127
    %v116 = vpop.permute.xlu0 %115
    %v117 = vsel %vm50, %v114, 0.0
    %v118 = vsel %vm50, %v116, 0.0
    %v119 = vadd.f32 %v111, %v61
    %v120 = vadd.f32 %v112, %v62
    %v121 = vadd.f32 %v119, %v117
    %v122 = vadd.f32 %v120, %v118
    %v123 = vrot.slane %v121, 7
    %v124 = vrot.slane %v122, 7
    %v125 = vsel %vm83, %v123, %v124
    %v126 = vsel %vm83, %v124, %v123
    %v127 = vsel %vm45, %v126, 0.0
    %v128 = vsel %vm46, %v125, 0.0
    %v129 = vrot.slane %v121, 1
    %v130 = vrot.slane %v122, 1
    %v131 = vsel %vm90, %v129, %v130
    %v132 = vsel %vm90, %v130, %v129
    %v133 = vsel %vm47, %v131, 0.0
    %v134 = vsel %vm48, %v132, 0.0
    %v135 = vadd.f32 %v127, %v121
    %v136 = vadd.f32 %v128, %v122
    %v137 = vadd.f32 %v135, %v133
    %v138 = vadd.f32 %v136, %v134
    %v139 = vsub.f32 %v105, %v137
    %v140 = vsub.f32 %v106, %v138
    %v141 = vtanh.pop %v139
    %v142 = vtanh.pop %v140
    %v143 = vand.u32 2147483647, %v141
    %v144 = vand.u32 2147483647, %v142
    %v145 = vsub.f32 0.0, %v143
    %v146 = vsub.f32 0.0, %v144
    %v147 = vmul.f32 %v145, 1.442695
    %v148 = vpow.pop %v147
    %v149 = vmul.f32 %v146, 1.442695
    %v150 = vpow.pop %v149
    %v151 = vadd.f32 %v148, 1.0
    %v152 = vadd.f32 %v150, 1.0
    %v153 = vlog2.pop %v151
    %v154 = vmul.f32 %v153, 0.6931472
    %v155 = vlog2.pop %v152
    %v156 = vmul.f32 %v155, 0.6931472
    %v157 = vsub.f32 1.0, %v103
    %v158 = vsub.f32 1.0, %v104
    %v159 = vmul.f32 %v157, %v143
    %v160 = vmul.f32 %v158, %v144
    %v161 = vadd.f32 %v159, %v154
    %v162 = vadd.f32 %v160, %v156
    %v163 = vsub.f32 0.0, %v61
    %v164 = vsub.f32 0.0, %v62
    %v165 = vmul.f32 %v163, 1.442695
    %v166 = vpow.pop %v165
    %v167 = vmul.f32 %v164, 1.442695
    %v168 = vpow.pop %v167
    %v169 = vadd.f32 %v166, 1.0
    %v170 = vadd.f32 %v168, 1.0
    %v171 = vlog2.pop %v169
    %v172 = vmul.f32 %v171, 0.6931472
    %v173 = vlog2.pop %v170
    %v174 = vmul.f32 %v173, 0.6931472
    %v175 = vsub.f32 1.0, %v53
    %v176 = vsub.f32 1.0, %v54
    %v177 = vmul.f32 %v175, %v61
    %v178 = vmul.f32 %v176, %v62
    %v179 = vadd.f32 %v177, %v172
    %v180 = vadd.f32 %v178, %v174
    %v181 = vmul.f32 %v179, 0.472
    %v182 = vmul.f32 %v180, 0.472
    %v183 = vmul.f32 %v53, 0.056
    %v184 = vmul.f32 %v54, 0.056
    %v185 = vmul.f32 %v183, %v172
    %v186 = vmul.f32 %v184, %v174
    %v187 = vadd.f32 %v181, %v185
    %v188 = vadd.f32 %v182, %v186
    %v189 = vmul.f32 %v187, 0.8
    %v190 = vmul.f32 %v188, 0.8
    %v191 = vmul.f32 %v161, 0.2
    %v192 = vmul.f32 %v162, 0.2
    %v193 = vadd.f32 %v189, %v191
    %v194 = vadd.f32 %v190, %v192
    %v195 = vadd.f32 %v193, 0.0
    %v196 = vadd.f32 %v194, 0.0
    %s197 = scalar_lea.vmem [#allocation2], 16
    %v198 = vld [vmem:[%s197] sm:$0xff]
    %v199 = vld [vmem:[%s197 + $0x8] sm:$0xff]
    %s200 = scalar_lea.vmem [#allocation5], 16
    %v201 = vld [vmem:[%s200] sm:$0xff]
    %v202 = vld [vmem:[%s200 + $0x8] sm:$0xff]
    %v203 = vmul.f32 %v198, 0.5
    %v204 = vmul.f32 %v199, 0.5
    %v205 = vtanh.pop %v203
    %v206 = vtanh.pop %v204
    %v207 = vadd.f32 %v205, 1.0
    %v208 = vadd.f32 %v206, 1.0
    %v209 = vmul.f32 %v207, 0.5
    %v210 = vmul.f32 %v208, 0.5
    %v211 = vmul.f32 %v201, 9.0
    %v212 = vmul.f32 %v202, 9.0
    %213 = vrot.lane.b32.xlu0 %v201, 1
    %v214 = vpop.permute.xlu0 %213
    %215 = vrot.lane.b32.xlu0 %v202, 1
    %v216 = vpop.permute.xlu0 %215
    %v217 = vsel %vm49, %v214, 0.0
    %v218 = vsel %vm49, %v216, 0.0
    %219 = vrot.lane.b32.xlu0 %v201, 127
    %v220 = vpop.permute.xlu0 %219
    %221 = vrot.lane.b32.xlu0 %v202, 127
    %v222 = vpop.permute.xlu0 %221
    %v223 = vsel %vm50, %v220, 0.0
    %v224 = vsel %vm50, %v222, 0.0
    %v225 = vadd.f32 %v217, %v201
    %v226 = vadd.f32 %v218, %v202
    %v227 = vadd.f32 %v225, %v223
    %v228 = vadd.f32 %v226, %v224
    %v229 = vrot.slane %v227, 7
    %v230 = vrot.slane %v228, 7
    %v231 = vsel %vm83, %v229, %v230
    %v232 = vsel %vm83, %v230, %v229
    %v233 = vsel %vm45, %v232, 0.0
    %v234 = vsel %vm46, %v231, 0.0
    %v235 = vrot.slane %v227, 1
    %v236 = vrot.slane %v228, 1
    %v237 = vsel %vm90, %v235, %v236
    %v238 = vsel %vm90, %v236, %v235
    %v239 = vsel %vm47, %v237, 0.0
    %v240 = vsel %vm48, %v238, 0.0
    %v241 = vadd.f32 %v233, %v227
    %v242 = vadd.f32 %v234, %v228
    %v243 = vadd.f32 %v241, %v239
    %v244 = vadd.f32 %v242, %v240
    %v245 = vsub.f32 %v211, %v243
    %v246 = vsub.f32 %v212, %v244
    %v247 = vtanh.pop %v245
    %v248 = vtanh.pop %v246
    %v249 = vand.u32 2147483647, %v247
    %v250 = vand.u32 2147483647, %v248
    %v251 = vmul.f32 %v209, 9.0
    %v252 = vmul.f32 %v210, 9.0
    %253 = vrot.lane.b32.xlu0 %v209, 1
    %v254 = vpop.permute.xlu0 %253
    %255 = vrot.lane.b32.xlu0 %v210, 1
    %v256 = vpop.permute.xlu0 %255
    %v257 = vsel %vm49, %v254, 0.0
    %v258 = vsel %vm49, %v256, 0.0
    %259 = vrot.lane.b32.xlu0 %v209, 127
    %v260 = vpop.permute.xlu0 %259
    %261 = vrot.lane.b32.xlu0 %v210, 127
    %v262 = vpop.permute.xlu0 %261
    %v263 = vsel %vm50, %v260, 0.0
    %v264 = vsel %vm50, %v262, 0.0
    %v265 = vadd.f32 %v257, %v209
    %v266 = vadd.f32 %v258, %v210
    %v267 = vadd.f32 %v265, %v263
    %v268 = vadd.f32 %v266, %v264
    %v269 = vrot.slane %v267, 7
    %v270 = vrot.slane %v268, 7
    %v271 = vsel %vm83, %v269, %v270
    %v272 = vsel %vm83, %v270, %v269
    %v273 = vsel %vm45, %v272, 0.0
    %v274 = vsel %vm46, %v271, 0.0
    %v275 = vrot.slane %v267, 1
    %v276 = vrot.slane %v268, 1
    %v277 = vsel %vm90, %v275, %v276
    %v278 = vsel %vm90, %v276, %v275
    %v279 = vsel %vm47, %v277, 0.0
    %v280 = vsel %vm48, %v278, 0.0
    %v281 = vadd.f32 %v273, %v267
    %v282 = vadd.f32 %v274, %v268
    %v283 = vadd.f32 %v281, %v279
    %v284 = vadd.f32 %v282, %v280
    %v285 = vsub.f32 %v251, %v283
    %v286 = vsub.f32 %v252, %v284
    %v287 = vtanh.pop %v285
    %v288 = vtanh.pop %v286
    %v289 = vand.u32 2147483647, %v287
    %v290 = vand.u32 2147483647, %v288
    %v291 = vsub.f32 0.0, %v289
    %v292 = vsub.f32 0.0, %v290
    %v293 = vmul.f32 %v291, 1.442695
    %v294 = vpow.pop %v293
    %v295 = vmul.f32 %v292, 1.442695
    %v296 = vpow.pop %v295
    %v297 = vadd.f32 %v294, 1.0
    %v298 = vadd.f32 %v296, 1.0
    %v299 = vlog2.pop %v297
    %v300 = vmul.f32 %v299, 0.6931472
    %v301 = vlog2.pop %v298
    %v302 = vmul.f32 %v301, 0.6931472
    %v303 = vsub.f32 1.0, %v249
    %v304 = vsub.f32 1.0, %v250
    %v305 = vmul.f32 %v303, %v289
    %v306 = vmul.f32 %v304, %v290
    %v307 = vadd.f32 %v305, %v300
    %v308 = vadd.f32 %v306, %v302
    %v309 = vsub.f32 0.0, %v209
    %v310 = vsub.f32 0.0, %v210
    %v311 = vmul.f32 %v309, 1.442695
    %v312 = vpow.pop %v311
    %v313 = vmul.f32 %v310, 1.442695
    %v314 = vpow.pop %v313
    %v315 = vadd.f32 %v312, 1.0
    %v316 = vadd.f32 %v314, 1.0
    %v317 = vlog2.pop %v315
    %v318 = vmul.f32 %v317, 0.6931472
    %v319 = vlog2.pop %v316
    %v320 = vmul.f32 %v319, 0.6931472
    %v321 = vsub.f32 1.0, %v201
    %v322 = vsub.f32 1.0, %v202
    %v323 = vmul.f32 %v321, %v209
    %v324 = vmul.f32 %v322, %v210
    %v325 = vadd.f32 %v323, %v318
    %v326 = vadd.f32 %v324, %v320
    %v327 = vmul.f32 %v325, 0.472
    %v328 = vmul.f32 %v326, 0.472
    %v329 = vmul.f32 %v201, 0.056
    %v330 = vmul.f32 %v202, 0.056
    %v331 = vmul.f32 %v329, %v318
    %v332 = vmul.f32 %v330, %v320
    %v333 = vadd.f32 %v327, %v331
    %v334 = vadd.f32 %v328, %v332
    %v335 = vmul.f32 %v333, 0.8
    %v336 = vmul.f32 %v334, 0.8
    %v337 = vmul.f32 %v307, 0.2
    %v338 = vmul.f32 %v308, 0.2
    %v339 = vadd.f32 %v335, %v337
    %v340 = vadd.f32 %v336, %v338
    %v341 = vadd.f32 %v195, %v339
    %v342 = vadd.f32 %v196, %v340
    %v343 = vadd.f32 %v341, %v342
    %344 = vadd.xlane.f32.xlu0 %v343
    %v345 = vpop.xlane.xlu0 %344
    %v346 = vrot.slane %v345, 4
    %v347 = vadd.f32 %v345, %v346
    %v348 = vrot.slane %v347, 2
    %v349 = vadd.f32 %v347, %v348
    %v350 = vrot.slane %v349, 1
    %v351 = vadd.f32 %v349, %v350
    %s352 = vtos %v351
    %s353 = scalar_lea.smem [#allocation7], 0
    %354 = sst [smem:[%s353]] %s352
    // Predicated region
    $region18: #{tpu_custom_call.1} parent=1 // pred_check
      _
    $region19: #{tpu_custom_call.1} parent=1 // pred_check_branch
      %356 = sbr.rel (0) target = $region21
    $region20: #{tpu_custom_call.1} parent=1 // pred_region
      %s358 = ssub.s32 16, 16
      %359 = vsyncadd [#allocation4], %s358
      %362 = dma.smem_to_hbm [#allocation7], 16, %s2, [#allocation4]
    $region21: #{tpu_custom_call.1} parent=1 // pred_fallthru
      _
    // Predicated region
    $region22: #{tpu_custom_call.1} parent=1 // pred_check
      _
    $region23: #{tpu_custom_call.1} parent=1 // pred_check_branch
      %364 = sbr.rel (0) target = $region25
    $region24: #{tpu_custom_call.1} parent=1 // pred_region
      %365 = dma.done [#allocation4], 16
    $region25: #{tpu_custom_call.1} parent=1 // pred_fallthru
      _
    %366 = sfence
    %367 = vsyncpa [#allocation3], 1
    %368 = vsyncpa [#allocation6], 1
    %369 = vsyncpa [#allocation4], 1

</llo_original>
